<compile_context>
chip_gen: v7x
topology: tpu7x:2x2x1
jax: 0.10.0
libtpu: 0.0.40
codegen_flags: <defaults>
</compile_context>

<pallas_src>
import functools

import jax
import jax.numpy as jnp
from jax import lax
from jax.experimental import pallas as pl
from jax.experimental.pallas import tpu as pltpu


_SLAB = 128   # lane width of one inner slab == accumulator width
_ROWG = 32    # sublane rows per register-resident partial group


def _round_up(x, m):
    return ((x + m - 1) // m) * m


def _neg_pearson_kernel(preds_ref, labels_ref, out_ref,
                        sx_ref, sy_ref, sxy_ref, sx2_ref, sy2_ref,
                        *, B, T, bm, tk, nt, rowg, slab):
    i = pl.program_id(0)        # batch-block index ("parallel")
    k = pl.program_id(1)        # time-block index ("arbitrary" reduction axis)

    @pl.when(k == 0)
    def _init():
        sx_ref[...] = jnp.zeros_like(sx_ref)
        sy_ref[...] = jnp.zeros_like(sy_ref)
        sxy_ref[...] = jnp.zeros_like(sxy_ref)
        sx2_ref[...] = jnp.zeros_like(sx2_ref)
        sy2_ref[...] = jnp.zeros_like(sy2_ref)

    def accumulate(valid_cols):
        # Single fused pass over the (bm, tk) tile: for each row group keep
        # five (rows, slab) f32 partials in registers, update them slab by
        # slab, and touch the VMEM accumulators once per row group.
        for r0 in range(0, bm, rowg):
            rows = min(rowg, bm - r0)
            ax = jnp.zeros((rows, slab), jnp.float32)
            ay = jnp.zeros((rows, slab), jnp.float32)
            axy = jnp.zeros((rows, slab), jnp.float32)
            ax2 = jnp.zeros((rows, slab), jnp.float32)
            ay2 = jnp.zeros((rows, slab), jnp.float32)
            for c0 in range(0, tk, slab):
                if c0 >= valid_cols:
                    break                      # slab entirely past T: skip
                xs = preds_ref[r0:r0 + rows, c0:c0 + slab].astype(jnp.float32)
                ys = labels_ref[r0:r0 + rows, c0:c0 + slab].astype(jnp.float32)
                if c0 + slab > valid_cols:
                    # Only the one straddling slab of the single edge block
                    # pays for masking (select, so overhang NaN cannot leak).
                    lane = lax.broadcasted_iota(jnp.int32, (rows, slab), 1)
                    valid = lane < (valid_cols - c0)
                    xs = jnp.where(valid, xs, 0.0)
                    ys = jnp.where(valid, ys, 0.0)
                ax = ax + xs
                ay = ay + ys
                axy = axy + xs * ys
                ax2 = ax2 + xs * xs
                ay2 = ay2 + ys * ys
            sx_ref[r0:r0 + rows, :] += ax
            sy_ref[r0:r0 + rows, :] += ay
            sxy_ref[r0:r0 + rows, :] += axy
            sx2_ref[r0:r0 + rows, :] += ax2
            sy2_ref[r0:r0 + rows, :] += ay2

    t_rem = T - (nt - 1) * tk      # static: valid columns in the last T block
    if t_rem == tk:
        # T is a multiple of tk: no mask anywhere in the hot loop.
        accumulate(tk)
    else:
        @pl.when(k < nt - 1)
        def _full_blocks():
            accumulate(tk)

        @pl.when(k == nt - 1)
        def _edge_block():
            accumulate(t_rem)

    @pl.when(k == nt - 1)
    def _finalize():
        # All cross-lane (XLU) reductions happen exactly once per batch block.
        N = jnp.float32(T)
        s_x = jnp.sum(sx_ref[...], axis=1, keepdims=True)
        s_y = jnp.sum(sy_ref[...], axis=1, keepdims=True)
        s_xy = jnp.sum(sxy_ref[...], axis=1, keepdims=True)
        s_x2 = jnp.sum(sx2_ref[...], axis=1, keepdims=True)
        s_y2 = jnp.sum(sy2_ref[...], axis=1, keepdims=True)
        num = N * s_xy - s_x * s_y
        var = (N * s_x2 - s_x * s_x) * (N * s_y2 - s_y * s_y)
        # rsqrt runs on the EUP slot: removes the VPU sqrt + divide.
        pearson = num * lax.rsqrt(var)
        res = 1.0 - pearson
        if B % bm != 0:
            # Mask padded batch rows (select, so garbage NaN cannot leak).
            row = lax.broadcasted_iota(jnp.int32, (bm, 1), 0) + i * bm
            res = jnp.where(row < B, res, 0.0)
        out_ref[...] = res


def neg_pearson_loss(preds, labels, *, bm=None, tk=None):
    """preds, labels: (B, T) arrays (f32 or bf16). Returns scalar f32 loss.

    bf16 inputs are accepted directly and accumulated in f32 inside the
    kernel (halves HBM traffic for the memory-bound case).  For tiny inputs
    (a few KiB) plain XLA beats the pallas_call fixed overhead; callers may
    dispatch on size if they care.
    """
    assert preds.shape == labels.shape and preds.ndim == 2
    B, T = preds.shape

    # Time tile: big (up to 2048 lanes) to amortize the ~0.35 us/step grid
    # overhead; batch tile: multiple of 8 sublanes, chosen so the "parallel"
    # axis has >= 2 blocks whenever B > 8 (keeps both v7x TensorCores busy).
    if tk is None:
        tk = min(2048, _round_up(T, 128))
    if bm is None:
        if B > 8:
            bm = min(256, _round_up(pl.cdiv(B, 2), 8))
        else:
            bm = _round_up(B, 8)
    nb = pl.cdiv(B, bm)
    nt = pl.cdiv(T, tk)

    kernel = functools.partial(
        _neg_pearson_kernel,
        B=B, T=T, bm=bm, tk=tk, nt=nt, rowg=_ROWG, slab=_SLAB)

    per_row = pl.pallas_call(
        kernel,
        out_shape=jax.ShapeDtypeStruct((nb * bm, 1), jnp.float32),
        grid_spec=pltpu.PrefetchScalarGridSpec(
            num_scalar_prefetch=0,
            grid=(nb, nt),
            in_specs=[
                pl.BlockSpec((bm, tk), lambda i, k: (i, k)),
                pl.BlockSpec((bm, tk), lambda i, k: (i, k)),
            ],
            out_specs=pl.BlockSpec((bm, 1), lambda i, k: (i, 0)),
            scratch_shapes=[pltpu.VMEM((bm, _SLAB), jnp.float32)
                            for _ in range(5)],
        ),
        compiler_params=pltpu.CompilerParams(
            dimension_semantics=("parallel", "arbitrary"),
            vmem_limit_bytes=48 << 20),
    )(preds, labels)

    # Padded rows were already masked to zero in-kernel; slice for safety and
    # finish the mean over the true batch.
    return jnp.sum(per_row[:B, 0]) / B


def _reference(preds, labels):
    # Pure-JAX reference mirroring the PyTorch loop, for sanity checking.
    N = preds.shape[1]
    p = preds.astype(jnp.float32)
    l = labels.astype(jnp.float32)
    sum_x = jnp.sum(p, axis=1)
    sum_y = jnp.sum(l, axis=1)
    sum_xy = jnp.sum(p * l, axis=1)
    sum_x2 = jnp.sum(p ** 2, axis=1)
    sum_y2 = jnp.sum(l ** 2, axis=1)
    pearson = (N * sum_xy - sum_x * sum_y) / jnp.sqrt(
        (N * sum_x2 - sum_x ** 2) * (N * sum_y2 - sum_y ** 2)
    )
    return jnp.mean(1.0 - pearson)


if __name__ == "__main__":
    key = jax.random.PRNGKey(0)
    k1, k2 = jax.random.split(key)
    B, T = 4, 128  # small batch of signals, each of length T
    preds = jax.random.normal(k1, (B, T), dtype=jnp.float32)
    labels = 0.7 * preds + 0.3 * jax.random.normal(k2, (B, T), dtype=jnp.float32)

    loss = neg_pearson_loss(preds, labels)
    jax.block_until_ready(loss)

    ref = _reference(preds, labels)
    assert jnp.allclose(loss, ref, rtol=1e-5, atol=1e-5), (loss, ref)
    print("KERNEL_OK")
</pallas_src>

<mosaic_0001>
module attributes {stable_mosaic.version = 11 : i64} {
  func.func @_neg_pearson_kernel(%arg0: i32, %arg1: i32, %arg2: memref<8x128xf32, #tpu.memory_space<vmem>>, %arg3: memref<8x128xf32, #tpu.memory_space<vmem>>, %arg4: memref<8x1xf32, #tpu.memory_space<vmem>>, %arg5: memref<8x128xf32, #tpu.memory_space<vmem>>, %arg6: memref<8x128xf32, #tpu.memory_space<vmem>>, %arg7: memref<8x128xf32, #tpu.memory_space<vmem>>, %arg8: memref<8x128xf32, #tpu.memory_space<vmem>>, %arg9: memref<8x128xf32, #tpu.memory_space<vmem>>) attributes {dimension_semantics = [#tpu.dimension_semantics<parallel>, #tpu.dimension_semantics<arbitrary>], iteration_bounds = array<i64: 1, 1>, scalar_prefetch = 0 : i64, scratch_operands = 5 : i64, tpu.core_type = #tpu.core_type<tc>, window_params = [{transform_indices = @transform_0, window_bounds = array<i64: 8, 128>}, {transform_indices = @transform_1, window_bounds = array<i64: 8, 128>}, {transform_indices = @transform_2, window_bounds = array<i64: 8, 1>}]} {
    %c0_i32 = arith.constant 0 : i32
    %0 = arith.cmpi eq, %arg1, %c0_i32 : i32
    %1 = arith.extui %0 : i1 to i32
    %c0_i32_0 = arith.constant 0 : i32
    %2 = arith.cmpi ne, %1, %c0_i32_0 : i32
    scf.if %2 {
      %cst_30 = arith.constant 0.000000e+00 : f32
      %36 = vector.broadcast %cst_30 : f32 to vector<8x128xf32>
      %c0_31 = arith.constant 0 : index
      %c0_32 = arith.constant 0 : index
      %37 = vector.load %arg5[%c0_31, %c0_32] : memref<8x128xf32, #tpu.memory_space<vmem>>, vector<8x128xf32>
      tpu.vector_store %arg5[%c0_31, %c0_32], %36 {strides = array<i32>} : memref<8x128xf32, #tpu.memory_space<vmem>>, vector<8x128xf32>,
      %cst_33 = arith.constant 0.000000e+00 : f32
      %38 = vector.broadcast %cst_33 : f32 to vector<8x128xf32>
      %c0_34 = arith.constant 0 : index
      %c0_35 = arith.constant 0 : index
      %39 = vector.load %arg6[%c0_34, %c0_35] : memref<8x128xf32, #tpu.memory_space<vmem>>, vector<8x128xf32>
      tpu.vector_store %arg6[%c0_34, %c0_35], %38 {strides = array<i32>} : memref<8x128xf32, #tpu.memory_space<vmem>>, vector<8x128xf32>,
      %cst_36 = arith.constant 0.000000e+00 : f32
      %40 = vector.broadcast %cst_36 : f32 to vector<8x128xf32>
      %c0_37 = arith.constant 0 : index
      %c0_38 = arith.constant 0 : index
      %41 = vector.load %arg7[%c0_37, %c0_38] : memref<8x128xf32, #tpu.memory_space<vmem>>, vector<8x128xf32>
      tpu.vector_store %arg7[%c0_37, %c0_38], %40 {strides = array<i32>} : memref<8x128xf32, #tpu.memory_space<vmem>>, vector<8x128xf32>,
      %cst_39 = arith.constant 0.000000e+00 : f32
      %42 = vector.broadcast %cst_39 : f32 to vector<8x128xf32>
      %c0_40 = arith.constant 0 : index
      %c0_41 = arith.constant 0 : index
      %43 = vector.load %arg8[%c0_40, %c0_41] : memref<8x128xf32, #tpu.memory_space<vmem>>, vector<8x128xf32>
      tpu.vector_store %arg8[%c0_40, %c0_41], %42 {strides = array<i32>} : memref<8x128xf32, #tpu.memory_space<vmem>>, vector<8x128xf32>,
      %cst_42 = arith.constant 0.000000e+00 : f32
      %44 = vector.broadcast %cst_42 : f32 to vector<8x128xf32>
      %c0_43 = arith.constant 0 : index
      %c0_44 = arith.constant 0 : index
      %45 = vector.load %arg9[%c0_43, %c0_44] : memref<8x128xf32, #tpu.memory_space<vmem>>, vector<8x128xf32>
      tpu.vector_store %arg9[%c0_43, %c0_44], %44 {strides = array<i32>} : memref<8x128xf32, #tpu.memory_space<vmem>>, vector<8x128xf32>,
    } else {
    }
    %cst = arith.constant 0.000000e+00 : f32
    %3 = vector.broadcast %cst : f32 to vector<8x128xf32>
    %cst_1 = arith.constant 0.000000e+00 : f32
    %4 = vector.broadcast %cst_1 : f32 to vector<8x128xf32>
    %cst_2 = arith.constant 0.000000e+00 : f32
    %5 = vector.broadcast %cst_2 : f32 to vector<8x128xf32>
    %cst_3 = arith.constant 0.000000e+00 : f32
    %6 = vector.broadcast %cst_3 : f32 to vector<8x128xf32>
    %cst_4 = arith.constant 0.000000e+00 : f32
    %7 = vector.broadcast %cst_4 : f32 to vector<8x128xf32>
    %c0 = arith.constant 0 : index
    %c0_5 = arith.constant 0 : index
    %8 = vector.load %arg2[%c0, %c0_5] : memref<8x128xf32, #tpu.memory_space<vmem>>, vector<8x128xf32>
    %c0_6 = arith.constant 0 : index
    %c0_7 = arith.constant 0 : index
    %9 = vector.load %arg3[%c0_6, %c0_7] : memref<8x128xf32, #tpu.memory_space<vmem>>, vector<8x128xf32>
    %10 = arith.addf %3, %8 : vector<8x128xf32>
    %11 = arith.addf %4, %9 : vector<8x128xf32>
    %12 = arith.mulf %8, %9 : vector<8x128xf32>
    %13 = arith.addf %5, %12 : vector<8x128xf32>
    %14 = arith.mulf %8, %8 : vector<8x128xf32>
    %15 = arith.addf %6, %14 : vector<8x128xf32>
    %16 = arith.mulf %9, %9 : vector<8x128xf32>
    %17 = arith.addf %7, %16 : vector<8x128xf32>
    %c0_8 = arith.constant 0 : index
    %c0_9 = arith.constant 0 : index
    %18 = vector.load %arg5[%c0_8, %c0_9] : memref<8x128xf32, #tpu.memory_space<vmem>>, vector<8x128xf32>
    %19 = arith.addf %18, %10 : vector<8x128xf32>
    %c0_10 = arith.constant 0 : index
    %c0_11 = arith.constant 0 : index
    %20 = vector.load %arg5[%c0_10, %c0_11] : memref<8x128xf32, #tpu.memory_space<vmem>>, vector<8x128xf32>
    tpu.vector_store %arg5[%c0_10, %c0_11], %19 {strides = array<i32>} : memref<8x128xf32, #tpu.memory_space<vmem>>, vector<8x128xf32>,
    %c0_12 = arith.constant 0 : index
    %c0_13 = arith.constant 0 : index
    %21 = vector.load %arg6[%c0_12, %c0_13] : memref<8x128xf32, #tpu.memory_space<vmem>>, vector<8x128xf32>
    %22 = arith.addf %21, %11 : vector<8x128xf32>
    %c0_14 = arith.constant 0 : index
    %c0_15 = arith.constant 0 : index
    %23 = vector.load %arg6[%c0_14, %c0_15] : memref<8x128xf32, #tpu.memory_space<vmem>>, vector<8x128xf32>
    tpu.vector_store %arg6[%c0_14, %c0_15], %22 {strides = array<i32>} : memref<8x128xf32, #tpu.memory_space<vmem>>, vector<8x128xf32>,
    %c0_16 = arith.constant 0 : index
    %c0_17 = arith.constant 0 : index
    %24 = vector.load %arg7[%c0_16, %c0_17] : memref<8x128xf32, #tpu.memory_space<vmem>>, vector<8x128xf32>
    %25 = arith.addf %24, %13 : vector<8x128xf32>
    %c0_18 = arith.constant 0 : index
    %c0_19 = arith.constant 0 : index
    %26 = vector.load %arg7[%c0_18, %c0_19] : memref<8x128xf32, #tpu.memory_space<vmem>>, vector<8x128xf32>
    tpu.vector_store %arg7[%c0_18, %c0_19], %25 {strides = array<i32>} : memref<8x128xf32, #tpu.memory_space<vmem>>, vector<8x128xf32>,
    %c0_20 = arith.constant 0 : index
    %c0_21 = arith.constant 0 : index
    %27 = vector.load %arg8[%c0_20, %c0_21] : memref<8x128xf32, #tpu.memory_space<vmem>>, vector<8x128xf32>
    %28 = arith.addf %27, %15 : vector<8x128xf32>
    %c0_22 = arith.constant 0 : index
    %c0_23 = arith.constant 0 : index
    %29 = vector.load %arg8[%c0_22, %c0_23] : memref<8x128xf32, #tpu.memory_space<vmem>>, vector<8x128xf32>
    tpu.vector_store %arg8[%c0_22, %c0_23], %28 {strides = array<i32>} : memref<8x128xf32, #tpu.memory_space<vmem>>, vector<8x128xf32>,
    %c0_24 = arith.constant 0 : index
    %c0_25 = arith.constant 0 : index
    %30 = vector.load %arg9[%c0_24, %c0_25] : memref<8x128xf32, #tpu.memory_space<vmem>>, vector<8x128xf32>
    %31 = arith.addf %30, %17 : vector<8x128xf32>
    %c0_26 = arith.constant 0 : index
    %c0_27 = arith.constant 0 : index
    %32 = vector.load %arg9[%c0_26, %c0_27] : memref<8x128xf32, #tpu.memory_space<vmem>>, vector<8x128xf32>
    tpu.vector_store %arg9[%c0_26, %c0_27], %31 {strides = array<i32>} : memref<8x128xf32, #tpu.memory_space<vmem>>, vector<8x128xf32>,
    %c0_i32_28 = arith.constant 0 : i32
    %33 = arith.cmpi eq, %arg1, %c0_i32_28 : i32
    %34 = arith.extui %33 : i1 to i32
    %c0_i32_29 = arith.constant 0 : i32
    %35 = arith.cmpi ne, %34, %c0_i32_29 : i32
    scf.if %35 {
      %c0_30 = arith.constant 0 : index
      %c0_31 = arith.constant 0 : index
      %36 = vector.load %arg5[%c0_30, %c0_31] : memref<8x128xf32, #tpu.memory_space<vmem>>, vector<8x128xf32>
      %cst_32 = arith.constant dense<0.000000e+00> : vector<8xf32>
      %37 = vector.multi_reduction <add>, %36, %cst_32 [1] : vector<8x128xf32> to vector<8xf32>
      %38 = vector.shape_cast %37 : vector<8xf32> to vector<8x1xf32>
      %c0_33 = arith.constant 0 : index
      %c0_34 = arith.constant 0 : index
      %39 = vector.load %arg6[%c0_33, %c0_34] : memref<8x128xf32, #tpu.memory_space<vmem>>, vector<8x128xf32>
      %cst_35 = arith.constant dense<0.000000e+00> : vector<8xf32>
      %40 = vector.multi_reduction <add>, %39, %cst_35 [1] : vector<8x128xf32> to vector<8xf32>
      %41 = vector.shape_cast %40 : vector<8xf32> to vector<8x1xf32>
      %c0_36 = arith.constant 0 : index
      %c0_37 = arith.constant 0 : index
      %42 = vector.load %arg7[%c0_36, %c0_37] : memref<8x128xf32, #tpu.memory_space<vmem>>, vector<8x128xf32>
      %cst_38 = arith.constant dense<0.000000e+00> : vector<8xf32>
      %43 = vector.multi_reduction <add>, %42, %cst_38 [1] : vector<8x128xf32> to vector<8xf32>
      %44 = vector.shape_cast %43 : vector<8xf32> to vector<8x1xf32>
      %c0_39 = arith.constant 0 : index
      %c0_40 = arith.constant 0 : index
      %45 = vector.load %arg8[%c0_39, %c0_40] : memref<8x128xf32, #tpu.memory_space<vmem>>, vector<8x128xf32>
      %cst_41 = arith.constant dense<0.000000e+00> : vector<8xf32>
      %46 = vector.multi_reduction <add>, %45, %cst_41 [1] : vector<8x128xf32> to vector<8xf32>
      %47 = vector.shape_cast %46 : vector<8xf32> to vector<8x1xf32>
      %c0_42 = arith.constant 0 : index
      %c0_43 = arith.constant 0 : index
      %48 = vector.load %arg9[%c0_42, %c0_43] : memref<8x128xf32, #tpu.memory_space<vmem>>, vector<8x128xf32>
      %cst_44 = arith.constant dense<0.000000e+00> : vector<8xf32>
      %49 = vector.multi_reduction <add>, %48, %cst_44 [1] : vector<8x128xf32> to vector<8xf32>
      %50 = vector.shape_cast %49 : vector<8xf32> to vector<8x1xf32>
      %cst_45 = arith.constant 1.280000e+02 : f32
      %51 = vector.broadcast %cst_45 : f32 to vector<8x1xf32>
      %52 = arith.mulf %51, %44 : vector<8x1xf32>
      %53 = arith.mulf %38, %41 : vector<8x1xf32>
      %54 = arith.subf %52, %53 : vector<8x1xf32>
      %cst_46 = arith.constant 1.280000e+02 : f32
      %55 = vector.broadcast %cst_46 : f32 to vector<8x1xf32>
      %56 = arith.mulf %55, %47 : vector<8x1xf32>
      %57 = arith.mulf %38, %38 : vector<8x1xf32>
      %58 = arith.subf %56, %57 : vector<8x1xf32>
      %cst_47 = arith.constant 1.280000e+02 : f32
      %59 = vector.broadcast %cst_47 : f32 to vector<8x1xf32>
      %60 = arith.mulf %59, %50 : vector<8x1xf32>
      %61 = arith.mulf %41, %41 : vector<8x1xf32>
      %62 = arith.subf %60, %61 : vector<8x1xf32>
      %63 = arith.mulf %58, %62 : vector<8x1xf32>
      %64 = math.rsqrt %63 : vector<8x1xf32>
      %65 = arith.mulf %54, %64 : vector<8x1xf32>
      %cst_48 = arith.constant 1.000000e+00 : f32
      %66 = vector.broadcast %cst_48 : f32 to vector<8x1xf32>
      %67 = arith.subf %66, %65 : vector<8x1xf32>
      %68 = tpu.iota {dimensions = array<i32: 0>} : vector<8x1xi32>
      %c8_i32 = arith.constant 8 : i32
      %69 = arith.muli %arg0, %c8_i32 : i32
      %70 = vector.broadcast %69 : i32 to vector<8x1xi32>
      %71 = arith.addi %68, %70 : vector<8x1xi32>
      %c4_i32 = arith.constant 4 : i32
      %72 = vector.broadcast %c4_i32 : i32 to vector<8x1xi32>
      %73 = arith.cmpi slt, %71, %72 : vector<8x1xi32>
      %cst_49 = arith.constant 0.000000e+00 : f32
      %74 = vector.broadcast %cst_49 : f32 to vector<8x1xf32>
      %75 = arith.select %73, %67, %74 : vector<8x1xi1>, vector<8x1xf32>
      %c0_50 = arith.constant 0 : index
      %c0_51 = arith.constant 0 : index
      %76 = vector.load %arg4[%c0_50, %c0_51] : memref<8x1xf32, #tpu.memory_space<vmem>>, vector<8x1xf32>
      tpu.vector_store %arg4[%c0_50, %c0_51], %75 {strides = array<i32>} : memref<8x1xf32, #tpu.memory_space<vmem>>, vector<8x1xf32>,
    } else {
    }
    return
  }
  func.func @transform_0(%arg0: i32, %arg1: i32) -> (i32, i32) {
    %c0_i32 = arith.constant 0 : i32
    return %arg0, %arg1 : i32, i32
  }
  func.func @transform_1(%arg0: i32, %arg1: i32) -> (i32, i32) {
    %c0_i32 = arith.constant 0 : i32
    return %arg0, %arg1 : i32, i32
  }
  func.func @transform_2(%arg0: i32, %arg1: i32) -> (i32, i32) {
    %c0_i32 = arith.constant 0 : i32
    %c0_i32_0 = arith.constant 0 : i32
    return %arg0, %c0_i32 : i32, i32
  }
}

</mosaic_0001>

<llo_original>
// kernel: tpu_custom_call.1
$region0: #{tpu_custom_call.1}
  #allocation0 [shape = 'u32[]', space=smem, size = 0x4, offset = 0x4, fixed_abs, tag = 'smem constant byte address 0x4 - core index']
  #allocation1 [shape = 'u32[144,128]{1,0:T(1,128)}', space=vmem, size = 0x12000, scoped, tag = 'internal scratch']
  #allocation2 [shape = 'f32[8,128]{1,0:T(8,128)}', space=vmem, size = 0x1000, scoped, tag = 'scratch operand']
  #allocation3 [shape = 'f32[8,128]{1,0:T(8,128)}', space=vmem, size = 0x1000, scoped, tag = 'scratch operand']
  #allocation4 [shape = 'f32[8,128]{1,0:T(8,128)}', space=vmem, size = 0x1000, scoped, tag = 'scratch operand']
  #allocation5 [shape = 'f32[8,128]{1,0:T(8,128)}', space=vmem, size = 0x1000, scoped, tag = 'scratch operand']
  #allocation6 [shape = 'f32[8,128]{1,0:T(8,128)}', space=vmem, size = 0x1000, scoped, tag = 'scratch operand']
  %s0 = inlined_call_operand.hbm [shape: f32[4,128], index: 0, kind: input, shape index: {}]
  %s1 = inlined_call_operand.hbm [shape: f32[4,128], index: 1, kind: input, shape index: {}]
  %s2 = inlined_call_operand.vmem [shape: f32[8,1], index: 2, kind: output, shape index: {}]
  %s3 = sld [smem:[#allocation0]]
  $region34: #{tpu_custom_call.1} parent=0
    _
  %s5 = ssub.s32 1, %s3
  %s6 = scalar_select 0, %s5, %s3
  $region1: #{tpu_custom_call.1} parent=0
    #allocation7 [shape = 'u8[4096]{0}', space=vmem, size = 0x1000, scoped, tag = 'input window, operand 0, single buffered']
    #allocation8 [shape = 's32[1]{0}', space=sflag, size = 0x4, scoped, tag = 'scoped memory for tpu_custom_call.1']
    #allocation9 [shape = 'u8[4096]{0}', space=vmem, size = 0x1000, scoped, tag = 'input window, operand 1, single buffered']
    #allocation10 [shape = 's32[1]{0}', space=sflag, size = 0x4, scoped, tag = 'scoped memory for tpu_custom_call.1']
    %7 = vsyncpa [#allocation8], 0
    %8 = vsyncpa [#allocation10], 0
    // Predicated region
    $region2: #{tpu_custom_call.1} parent=1 // pred_check
      _
    $region3: #{tpu_custom_call.1} parent=1 // pred_check_branch
      %10 = sbr.rel (0) target = $region5
    $region4: #{tpu_custom_call.1} parent=1 // pred_region
      %s12 = ssub.s32 128, 64
      %13 = vsyncadd [#allocation8], %s12
      %s14 = sshll.u32 [#allocation7], 4
      %s15 = int_to_ptr.vmem [resolvable:$true] %s14
      %20 = dma.hbm_to_vmem [thread:$0]  %s0, 64, %s15, [#allocation8], 64, 64, 4
    $region5: #{tpu_custom_call.1} parent=1 // pred_fallthru
      _
    // Predicated region
    $region6: #{tpu_custom_call.1} parent=1 // pred_check
      _
    $region7: #{tpu_custom_call.1} parent=1 // pred_check_branch
      %22 = sbr.rel (0) target = $region9
    $region8: #{tpu_custom_call.1} parent=1 // pred_region
      %s24 = ssub.s32 128, 64
      %25 = vsyncadd [#allocation10], %s24
      %s26 = sshll.u32 [#allocation9], 4
      %s27 = int_to_ptr.vmem [resolvable:$true] %s26
      %32 = dma.hbm_to_vmem [thread:$0]  %s1, 64, %s27, [#allocation10], 64, 64, 4
    $region9: #{tpu_custom_call.1} parent=1 // pred_fallthru
      _
    // Predicated region
    $region10: #{tpu_custom_call.1} parent=1 // pred_check
      _
    $region11: #{tpu_custom_call.1} parent=1 // pred_check_branch
      %34 = sbr.rel (0) target = $region13
    $region12: #{tpu_custom_call.1} parent=1 // pred_region
      %35 = dma.done [#allocation8], 128
    $region13: #{tpu_custom_call.1} parent=1 // pred_fallthru
      _
    // Predicated region
    $region14: #{tpu_custom_call.1} parent=1 // pred_check
      _
    $region15: #{tpu_custom_call.1} parent=1 // pred_check_branch
      %37 = sbr.rel (0) target = $region17
    $region16: #{tpu_custom_call.1} parent=1 // pred_region
      %38 = dma.done [#allocation10], 128
    $region17: #{tpu_custom_call.1} parent=1 // pred_fallthru
      _
    %p39 = scmp.eq.s32.totalorder 0, 0
    // Predicated region
    $region18: #{tpu_custom_call.1} parent=1 // pred_check
      %p40 = pneg %p39
    $region19: #{tpu_custom_call.1} parent=1 // pred_check_branch
      %42 = sbr.rel (%p40) target = $region21
    $region20: #{tpu_custom_call.1} parent=1 // pred_region
      %43 = vst [vmem:[#allocation2] sm:$0xff] 0.0
      %44 = vst [vmem:[#allocation3] sm:$0xff] 0.0
      %45 = vst [vmem:[#allocation4] sm:$0xff] 0.0
      %46 = vst [vmem:[#allocation5] sm:$0xff] 0.0
      %47 = vst [vmem:[#allocation6] sm:$0xff] 0.0
    $region21: #{tpu_custom_call.1} parent=1 // pred_fallthru
      _
    %v48 = vld [vmem:[#allocation7] sm:$0xff]
    %v49 = vld [vmem:[#allocation9] sm:$0xff]
    %v50 = vadd.f32 %v48, 0.0
    %v51 = vadd.f32 %v49, 0.0
    %v52 = vmul.f32 %v48, %v49
    %v53 = vadd.f32 %v52, 0.0
    %v54 = vmul.f32 %v48, %v48
    %v55 = vadd.f32 %v54, 0.0
    %v56 = vmul.f32 %v49, %v49
    %v57 = vadd.f32 %v56, 0.0
    %v58 = vld [vmem:[#allocation2] sm:$0xff]
    %v59 = vadd.f32 %v58, %v50
    %60 = vst [vmem:[#allocation2] sm:$0xff] %v59
    %v61 = vld [vmem:[#allocation3] sm:$0xff]
    %v62 = vadd.f32 %v61, %v51
    %63 = vst [vmem:[#allocation3] sm:$0xff] %v62
    %v64 = vld [vmem:[#allocation4] sm:$0xff]
    %v65 = vadd.f32 %v64, %v53
    %66 = vst [vmem:[#allocation4] sm:$0xff] %v65
    %v67 = vld [vmem:[#allocation5] sm:$0xff]
    %v68 = vadd.f32 %v67, %v55
    %69 = vst [vmem:[#allocation5] sm:$0xff] %v68
    %v70 = vld [vmem:[#allocation6] sm:$0xff]
    %v71 = vadd.f32 %v70, %v57
    %72 = vst [vmem:[#allocation6] sm:$0xff] %v71
    // Predicated region
    $region22: #{tpu_custom_call.1} parent=1 // pred_check
      %p73 = pneg %p39
    $region23: #{tpu_custom_call.1} parent=1 // pred_check_branch
      %75 = sbr.rel (%p73) target = $region25
    $region24: #{tpu_custom_call.1} parent=1 // pred_region
      %v76 = vld [vmem:[#allocation2] sm:$0xff]
      %77 = vadd.xlane.f32.xlu0 %v76
      %v78 = vpop.xlane.xlu0 %77
      %v79 = vld [vmem:[#allocation3] sm:$0xff]
      %80 = vadd.xlane.f32.xlu0 %v79
      %v81 = vpop.xlane.xlu0 %80
      %v82 = vld [vmem:[#allocation4] sm:$0xff]
      %83 = vadd.xlane.f32.xlu0 %v82
      %v84 = vpop.xlane.xlu0 %83
      %v85 = vld [vmem:[#allocation5] sm:$0xff]
      %86 = vadd.xlane.f32.xlu0 %v85
      %v87 = vpop.xlane.xlu0 %86
      %v88 = vld [vmem:[#allocation6] sm:$0xff]
      %89 = vadd.xlane.f32.xlu0 %v88
      %v90 = vpop.xlane.xlu0 %89
      %v91 = vmul.f32 %v84, 128.0
      %v92 = vmul.f32 %v78, %v81
      %v93 = vsub.f32 %v91, %v92
      %v94 = vmul.f32 %v87, 128.0
      %v95 = vmul.f32 %v78, %v78
      %v96 = vsub.f32 %v94, %v95
      %v97 = vmul.f32 %v90, 128.0
      %v98 = vmul.f32 %v81, %v81
      %v99 = vsub.f32 %v97, %v98
      %v100 = vmul.f32 %v96, %v99
      %v101 = vrsqrt.pop %v100
      %v102 = vmul.f32 %v93, %v101
      %v103 = vsub.f32 1.0, %v102
      %v104 = vlaneseq
      %v105 = vshrl.u32 %v104, 7
      %s106 = smul.u32 0, 8
      %v107 = vstv %s106
      %v108 = vadd.s32 %v105, %v107
      %vm109 = vcmp.lt.s32.totalorder %v108, 4
      %v110 = vsel %vm109, %v103, 0.0
      %vm111 = vcmask 7168
      %112 = vst.msk [vmem:[%s2] sm:$0xff] %vm111, %v110
    $region25: #{tpu_custom_call.1} parent=1 // pred_fallthru
      _
    // Predicated region
    $region26: #{tpu_custom_call.1} parent=1 // pred_check
      _
    $region27: #{tpu_custom_call.1} parent=1 // pred_check_branch
      %114 = sbr.rel (0) target = $region29
    $region28: #{tpu_custom_call.1} parent=1 // pred_region
      _
    $region29: #{tpu_custom_call.1} parent=1 // pred_fallthru
      _
    // Predicated region
    $region30: #{tpu_custom_call.1} parent=1 // pred_check
      _
    $region31: #{tpu_custom_call.1} parent=1 // pred_check_branch
      %116 = sbr.rel (0) target = $region33
    $region32: #{tpu_custom_call.1} parent=1 // pred_region
      _
    $region33: #{tpu_custom_call.1} parent=1 // pred_fallthru
      _
    %117 = vsyncpa [#allocation8], 1
    %118 = vsyncpa [#allocation10], 1

</llo_original>
